<compile_context>
chip_gen: v6e
topology: v6e:2x2x1
jax: 0.10.0
libtpu: 0.0.40
codegen_flags: <defaults>
</compile_context>

<pallas_src>
import functools

import numpy as np
import jax
import jax.numpy as jnp
from jax.experimental import pallas as pl
from jax.experimental.pallas import tpu as pltpu


# On v6e/v7x, set to jnp.bfloat16 to halve matmul operand traffic and hit the
# fast MXU path (accumulation stays f32 via preferred_element_type; bias+tanh
# stay f32, which is also required on v5e).  Kept f32 here so the tiny example
# matches the f32 PyTorch reference exactly; matmuls are not the bottleneck at
# these shapes.
MATMUL_DTYPE = jnp.float32

_VMEM = pl.BlockSpec(memory_space=pltpu.MemorySpace.VMEM)


# -----------------------------------------------------------------------------
# Fused Pallas kernel: whole TCNN forward in one launch, everything in VMEM.
# -----------------------------------------------------------------------------
def tcnn_fused_kernel(h_ref, *rest, n_layers):
    """Refs (all VMEM, full arrays):
       h_ref : (B, L*C0)           time-major flattened input activations
       rest  : [m_0, bt_0, ..., m_{n-1}, bt_{n-1}, lin_w, lin_b, o_ref]
         m_i  : (L*C_i, L*C_{i+1}) block-banded causal-conv matrix (exact conv)
         bt_i : (1, L*C_{i+1})     bias tiled over time
         lin_w: (L*C_n, outsize)   head weight, rows permuted to time-major
         lin_b: (1, outsize)
         o_ref: (B, outsize)
    """
    o_ref = rest[-1]
    h = h_ref[...]
    for i in range(n_layers):                       # static unroll over layers
        m = rest[2 * i][...]
        bt = rest[2 * i + 1][...]
        acc = jnp.dot(h.astype(MATMUL_DTYPE), m.astype(MATMUL_DTYPE),
                      preferred_element_type=jnp.float32)
        h = jnp.tanh(acc + bt)                      # bias + tanh in f32 (v5e-safe)
    lin_w = rest[2 * n_layers][...]
    lin_b = rest[2 * n_layers + 1][...]
    o_ref[...] = jnp.dot(h.astype(MATMUL_DTYPE), lin_w.astype(MATMUL_DTYPE),
                         preferred_element_type=jnp.float32) + lin_b


# -----------------------------------------------------------------------------
# Wrapper: weight reshaping (static structure) + single pallas_call.
# -----------------------------------------------------------------------------
def _banded_conv_matrix(w_kio, dilation, L):
    """Exact causal dilated conv as a (L*Cin, L*Cout) matrix.

    M[t_in*Cin + ci, t_out*Cout + co] = w[j, ci, co] where the causal tap j
    satisfies t_out - t_in == (K-1-j)*dilation (and 0 <= j < K); else 0.
    """
    K, Cin, Cout = w_kio.shape
    delta = np.arange(L)[None, :] - np.arange(L)[:, None]          # t_out - t_in
    valid = (delta >= 0) & (delta % dilation == 0) & (delta // dilation <= K - 1)
    tap = np.where(valid, (K - 1) - delta // dilation, 0)          # static (L, L)
    m4 = jnp.where(valid[:, :, None, None], w_kio[tap], 0.0)       # (L, L, Cin, Cout)
    # rows indexed (t_in, ci), cols indexed (t_out, co)
    return m4.transpose(0, 2, 1, 3).reshape(L * Cin, L * Cout)


def tcnn_forward(params, x_bcl, *, dilations):
    """x_bcl: (B, Cin, L) -- same NCW layout as the PyTorch module."""
    convs = params["convs"]
    n_layers = len(convs)
    B, Cin, L = x_bcl.shape
    outsize = params["lin_w"].shape[-1]
    c_last = convs[-1]["w"].shape[-1]

    # Time-major flatten of the input: h0[b, t*Cin + ci] = x[b, ci, t].
    h0 = jnp.transpose(x_bcl, (0, 2, 1)).reshape(B, L * Cin)

    operands = [h0]
    for layer, d in zip(convs, dilations):
        cout = layer["w"].shape[-1]
        operands.append(_banded_conv_matrix(layer["w"], int(d), L))
        operands.append(jnp.tile(layer["b"], L).reshape(1, L * cout))

    # Fold torch's channel-major flatten (flat index = c*L + t) into the head
    # weight so the kernel consumes the time-major (B, L*C) layout directly.
    lin_w_tm = (params["lin_w"]
                .reshape(c_last, L, outsize)
                .transpose(1, 0, 2)
                .reshape(L * c_last, outsize))
    operands.append(lin_w_tm)
    operands.append(params["lin_b"].reshape(1, outsize))

    kernel = functools.partial(tcnn_fused_kernel, n_layers=n_layers)
    return pl.pallas_call(
        kernel,
        out_shape=jax.ShapeDtypeStruct((B, outsize), jnp.float32),
        in_specs=[_VMEM] * len(operands),
        out_specs=_VMEM,
        # No grid: the whole net fits in VMEM on any generation at these sizes.
        # TODO(synk): for large B/L, tile with a grid over B and set
        # dimension_semantics=("parallel",) so v7x's second TensorCore is used.
    )(*operands)


# -----------------------------------------------------------------------------
# Parameter init (mimics PyTorch U(-1/sqrt(fan_in), 1/sqrt(fan_in)))
# -----------------------------------------------------------------------------
def init_tcnn_params(key, insize, outsize, hidden_dims, kernel_sizes):
    in_length, in_channels = insize
    dims = [in_channels] + list(hidden_dims)
    params = {"convs": []}
    for i in range(len(dims) - 1):
        cin, cout, k = dims[i], dims[i + 1], kernel_sizes[i]
        key, kw, kb = jax.random.split(key, 3)
        bound = 1.0 / float(np.sqrt(cin * k))
        # tap-major (K, Cin, Cout) == torch conv.weight (Cout, Cin, K) transposed
        w = jax.random.uniform(kw, (k, cin, cout), jnp.float32, -bound, bound)
        b = jax.random.uniform(kb, (cout,), jnp.float32, -bound, bound)
        params["convs"].append({"w": w, "b": b})
    feat = hidden_dims[-1] * in_length
    key, kw, kb = jax.random.split(key, 3)
    bound = 1.0 / float(np.sqrt(feat))
    # (feat, outsize) == torch linear.weight (outsize, feat) transposed; feat is
    # channel-major (c*L + t), exactly like torch flatten(start_dim=-2).
    params["lin_w"] = jax.random.uniform(kw, (feat, outsize), jnp.float32, -bound, bound)
    params["lin_b"] = jax.random.uniform(kb, (outsize,), jnp.float32, -bound, bound)
    return params


# -----------------------------------------------------------------------------
# Pure-JAX reference (same semantics as the PyTorch module) for validation.
# -----------------------------------------------------------------------------
def tcnn_reference(params, x_bcl, dilations):
    out = jnp.transpose(x_bcl, (0, 2, 1))                       # (B, L, C)
    for layer, d in zip(params["convs"], dilations):
        w, b = layer["w"], layer["b"]                           # (K,Cin,Cout), (Cout,)
        K = w.shape[0]
        L = out.shape[1]
        pad = (K - 1) * d
        xp = jnp.pad(out, ((0, 0), (pad, 0), (0, 0)))           # causal left pad
        acc = sum(jnp.einsum("blc,cd->bld", xp[:, j * d:j * d + L, :], w[j])
                  for j in range(K))
        out = jnp.tanh(acc + b)
    B, L, C = out.shape
    flat = jnp.transpose(out, (0, 2, 1)).reshape(B, C * L)      # channel-major flatten
    return flat @ params["lin_w"] + params["lin_b"]


# -----------------------------------------------------------------------------
if __name__ == "__main__":
    key = jax.random.PRNGKey(0)

    # small config consistent with TCNN.__init__
    in_length, in_channels = 16, 4            # insize = (seq length, in channels)
    hidden_dims = [8, 8]
    kernel_sizes = [3, 3]
    dilations = (1, 2)
    outsize = 6
    batch = 2

    key, kp, kx = jax.random.split(key, 3)
    params = init_tcnn_params(kp, (in_length, in_channels), outsize,
                              hidden_dims, kernel_sizes)
    x = jax.random.normal(kx, (batch, in_channels, in_length), jnp.float32)

    fwd = jax.jit(functools.partial(tcnn_forward, dilations=dilations))
    y = fwd(params, x)
    jax.block_until_ready(y)

    assert y.shape == (batch, outsize), y.shape
    assert bool(jnp.all(jnp.isfinite(y)))

    y_ref = tcnn_reference(params, x, dilations)
    assert jnp.allclose(y, y_ref, rtol=1e-4, atol=1e-4), \
        float(jnp.max(jnp.abs(y - y_ref)))

    print("KERNEL_OK")
</pallas_src>

<mosaic_0001>
module attributes {stable_mosaic.version = 11 : i64} {
  func.func @tcnn_fused_kernel(%arg0: memref<2x64xf32, #tpu.memory_space<vmem>>, %arg1: memref<64x128xf32, #tpu.memory_space<vmem>>, %arg2: memref<1x128xf32, #tpu.memory_space<vmem>>, %arg3: memref<128x128xf32, #tpu.memory_space<vmem>>, %arg4: memref<1x128xf32, #tpu.memory_space<vmem>>, %arg5: memref<128x6xf32, #tpu.memory_space<vmem>>, %arg6: memref<1x6xf32, #tpu.memory_space<vmem>>, %arg7: memref<2x6xf32, #tpu.memory_space<vmem>>) attributes {dimension_semantics = [], scalar_prefetch = 0 : i64, scratch_operands = 0 : i64, tpu.core_type = #tpu.core_type<tc>} {
    %c0 = arith.constant 0 : index
    %c0_0 = arith.constant 0 : index
    %0 = vector.load %arg0[%c0, %c0_0] : memref<2x64xf32, #tpu.memory_space<vmem>>, vector<2x64xf32>
    %c0_1 = arith.constant 0 : index
    %c0_2 = arith.constant 0 : index
    %1 = vector.load %arg1[%c0_1, %c0_2] : memref<64x128xf32, #tpu.memory_space<vmem>>, vector<64x128xf32>
    %c0_3 = arith.constant 0 : index
    %c0_4 = arith.constant 0 : index
    %2 = vector.load %arg2[%c0_3, %c0_4] : memref<1x128xf32, #tpu.memory_space<vmem>>, vector<1x128xf32>
    %cst = arith.constant dense<0.000000e+00> : vector<2x128xf32>
    %3 = tpu.matmul %0, %1, %cst {dimension_numbers = #tpu.dot_dimension_numbers<[1], [0], [0], [1], [0, 0, 1, 1], [], []>} : vector<2x64xf32>, vector<64x128xf32>, vector<2x128xf32> -> vector<2x128xf32>
    %4 = vector.broadcast %2 : vector<1x128xf32> to vector<2x128xf32>
    %5 = arith.addf %3, %4 : vector<2x128xf32>
    %6 = math.tanh %5 : vector<2x128xf32>
    %c0_5 = arith.constant 0 : index
    %c0_6 = arith.constant 0 : index
    %7 = vector.load %arg3[%c0_5, %c0_6] : memref<128x128xf32, #tpu.memory_space<vmem>>, vector<128x128xf32>
    %c0_7 = arith.constant 0 : index
    %c0_8 = arith.constant 0 : index
    %8 = vector.load %arg4[%c0_7, %c0_8] : memref<1x128xf32, #tpu.memory_space<vmem>>, vector<1x128xf32>
    %cst_9 = arith.constant dense<0.000000e+00> : vector<2x128xf32>
    %9 = tpu.matmul %6, %7, %cst_9 {dimension_numbers = #tpu.dot_dimension_numbers<[1], [0], [0], [1], [0, 0, 1, 1], [], []>} : vector<2x128xf32>, vector<128x128xf32>, vector<2x128xf32> -> vector<2x128xf32>
    %10 = vector.broadcast %8 : vector<1x128xf32> to vector<2x128xf32>
    %11 = arith.addf %9, %10 : vector<2x128xf32>
    %12 = math.tanh %11 : vector<2x128xf32>
    %c0_10 = arith.constant 0 : index
    %c0_11 = arith.constant 0 : index
    %13 = vector.load %arg5[%c0_10, %c0_11] : memref<128x6xf32, #tpu.memory_space<vmem>>, vector<128x6xf32>
    %c0_12 = arith.constant 0 : index
    %c0_13 = arith.constant 0 : index
    %14 = vector.load %arg6[%c0_12, %c0_13] : memref<1x6xf32, #tpu.memory_space<vmem>>, vector<1x6xf32>
    %cst_14 = arith.constant dense<0.000000e+00> : vector<2x6xf32>
    %15 = tpu.matmul %12, %13, %cst_14 {dimension_numbers = #tpu.dot_dimension_numbers<[1], [0], [0], [1], [0, 0, 1, 1], [], []>} : vector<2x128xf32>, vector<128x6xf32>, vector<2x6xf32> -> vector<2x6xf32>
    %16 = vector.broadcast %14 : vector<1x6xf32> to vector<2x6xf32>
    %17 = arith.addf %15, %16 : vector<2x6xf32>
    %c0_15 = arith.constant 0 : index
    %c0_16 = arith.constant 0 : index
    %18 = vector.load %arg7[%c0_15, %c0_16] : memref<2x6xf32, #tpu.memory_space<vmem>>, vector<2x6xf32>
    tpu.vector_store %arg7[%c0_15, %c0_16], %17 {strides = array<i32>} : memref<2x6xf32, #tpu.memory_space<vmem>>, vector<2x6xf32>,
    return
  }
}

</mosaic_0001>

<llo_original>
// kernel: tile.13
$region0: #{tile.13}
  #allocation0 [shape = 's32[1]{0}', space=sflag, size = 0x4, scoped, tag = 'scoped memory for tile.13']
  %s0 = inlined_call_operand.vmem [shape: f32[8], index: 0, kind: input, shape index: {}]
  %s1 = inlined_call_operand.vmem [shape: f32[16,8], index: 1, kind: output, shape index: {}]
  // Predicated region
  $region2: #{tile.13} parent=0 // pred_check
    _
  $region3: #{tile.13} parent=0 // pred_check_branch
    %3 = sbr.rel (0) target = $region5
  $region4: #{tile.13} parent=0 // pred_region
    _
  $region5: #{tile.13} parent=0 // pred_fallthru
    _
  %v4 = vld [vmem:[%s0] ss:$0 sm:$0xff]
  %5 = vst [vmem:[%s1] sm:$0xff] %v4
  %s6 = scalar_lea.vmem %s1, 8
  %7 = vst [vmem:[%s6] sm:$0xff] %v4

// kernel: tile.14
$region0: #{tile.14}
  %s0 = inlined_call_operand.vmem [shape: f32[16,8], index: 0, kind: input, shape index: {}]
  %s1 = inlined_call_operand.vmem [shape: f32[1,128], index: 1, kind: output, shape index: {}]
  $region1: #{tile.14} parent=0
    #allocation0 [shape = 'u8[4096]{0}', space=vmem, size = 0x1000, scoped, tag = 'scoped mem for output reshape']
    %v2 = vld [vmem:[%s0] sm:$0x1]
    %vm3 = vcmask 64512
    %4 = vst.msk [vmem:[#allocation0] sm:$0x1] %vm3, %v2
    %s5 = scalar_lea.vmem %s0, 15
    %v6 = vld [vmem:[%s5] sm:$0x1]
    %7 = vrot.lane.b32.xlu0 %v6, 120
    %v8 = vpop.permute.xlu0 %7
    %vm9 = vcmask 1048512
    %10 = vst.msk [vmem:[#allocation0] sm:$0x1] %vm9, %v8
    %s11 = scalar_lea.vmem %s0, 14
    %v12 = vld [vmem:[%s11] sm:$0x1]
    %13 = vrot.lane.b32.xlu0 %v12, 112
    %v14 = vpop.permute.xlu0 %13
    %vm15 = vcmask 982912
    %16 = vst.msk [vmem:[#allocation0] sm:$0x1] %vm15, %v14
    %s17 = scalar_lea.vmem %s0, 13
    %v18 = vld [vmem:[%s17] sm:$0x1]
    %19 = vrot.lane.b32.xlu0 %v18, 104
    %v20 = vpop.permute.xlu0 %19
    %vm21 = vcmask 917312
    %22 = vst.msk [vmem:[#allocation0] sm:$0x1] %vm21, %v20
    %s23 = scalar_lea.vmem %s0, 12
    %v24 = vld [vmem:[%s23] sm:$0x1]
    %25 = vrot.lane.b32.xlu0 %v24, 96
    %v26 = vpop.permute.xlu0 %25
    %vm27 = vcmask 851712
    %28 = vst.msk [vmem:[#allocation0] sm:$0x1] %vm27, %v26
    %s29 = scalar_lea.vmem %s0, 11
    %v30 = vld [vmem:[%s29] sm:$0x1]
    %31 = vrot.lane.b32.xlu0 %v30, 88
    %v32 = vpop.permute.xlu0 %31
    %vm33 = vcmask 786112
    %34 = vst.msk [vmem:[#allocation0] sm:$0x1] %vm33, %v32
    %s35 = scalar_lea.vmem %s0, 10
    %v36 = vld [vmem:[%s35] sm:$0x1]
    %37 = vrot.lane.b32.xlu0 %v36, 80
    %v38 = vpop.permute.xlu0 %37
    %vm39 = vcmask 720512
    %40 = vst.msk [vmem:[#allocation0] sm:$0x1] %vm39, %v38
    %s41 = scalar_lea.vmem %s0, 9
    %v42 = vld [vmem:[%s41] sm:$0x1]
    %43 = vrot.lane.b32.xlu0 %v42, 72
    %v44 = vpop.permute.xlu0 %43
    %vm45 = vcmask 654912
    %46 = vst.msk [vmem:[#allocation0] sm:$0x1] %vm45, %v44
    %s47 = scalar_lea.vmem %s0, 8
    %v48 = vld [vmem:[%s47] sm:$0x1]
    %49 = vrot.lane.b32.xlu0 %v48, 64
    %v50 = vpop.permute.xlu0 %49
    %vm51 = vcmask 589312
    %52 = vst.msk [vmem:[#allocation0] sm:$0x1] %vm51, %v50
    %s53 = scalar_lea.vmem %s0, 7
    %v54 = vld [vmem:[%s53] sm:$0x1]
    %55 = vrot.lane.b32.xlu0 %v54, 56
    %v56 = vpop.permute.xlu0 %55
    %vm57 = vcmask 523712
    %58 = vst.msk [vmem:[#allocation0] sm:$0x1] %vm57, %v56
    %s59 = scalar_lea.vmem %s0, 6
    %v60 = vld [vmem:[%s59] sm:$0x1]
    %61 = vrot.lane.b32.xlu0 %v60, 48
    %v62 = vpop.permute.xlu0 %61
    %vm63 = vcmask 458112
    %64 = vst.msk [vmem:[#allocation0] sm:$0x1] %vm63, %v62
    %s65 = scalar_lea.vmem %s0, 5
    %v66 = vld [vmem:[%s65] sm:$0x1]
    %67 = vrot.lane.b32.xlu0 %v66, 40
    %v68 = vpop.permute.xlu0 %67
    %vm69 = vcmask 392512
    %70 = vst.msk [vmem:[#allocation0] sm:$0x1] %vm69, %v68
    %s71 = scalar_lea.vmem %s0, 4
    %v72 = vld [vmem:[%s71] sm:$0x1]
    %73 = vrot.lane.b32.xlu0 %v72, 32
    %v74 = vpop.permute.xlu0 %73
    %vm75 = vcmask 326912
    %76 = vst.msk [vmem:[#allocation0] sm:$0x1] %vm75, %v74
    %s77 = scalar_lea.vmem %s0, 3
    %v78 = vld [vmem:[%s77] sm:$0x1]
    %79 = vrot.lane.b32.xlu0 %v78, 24
    %v80 = vpop.permute.xlu0 %79
    %vm81 = vcmask 261312
    %82 = vst.msk [vmem:[#allocation0] sm:$0x1] %vm81, %v80
    %s83 = scalar_lea.vmem %s0, 2
    %v84 = vld [vmem:[%s83] sm:$0x1]
    %85 = vrot.lane.b32.xlu0 %v84, 16
    %v86 = vpop.permute.xlu0 %85
    %vm87 = vcmask 195712
    %88 = vst.msk [vmem:[#allocation0] sm:$0x1] %vm87, %v86
    %s89 = scalar_lea.vmem %s0, 1
    %v90 = vld [vmem:[%s89] sm:$0x1]
    %91 = vrot.lane.b32.xlu0 %v90, 8
    %v92 = vpop.permute.xlu0 %91
    %vm93 = vcmask 130112
    %94 = vst.msk [vmem:[#allocation0] sm:$0x1] %vm93, %v92
    %s96 = sshll.u32 1, 1
    %s97 = ssub.s32 %s96, 1
    %v99 = vld [vmem:[#allocation0] sm:%s97]
    %s100 = sshll.u32 1, 1
    %s101 = ssub.s32 %s100, 1
    %102 = vst [vmem:[%s1] sm:%s101] %v99

// kernel: tcnn_forward.1
$region0: #{tcnn_forward.1}
  #allocation0 [shape = 'u32[]', space=smem, size = 0x4, offset = 0x4, fixed_abs, tag = 'smem constant byte address 0x4 - core index']
  #allocation1 [shape = 'u32[144,128]{1,0:T(1,128)}', space=vmem, size = 0x12000, scoped, tag = 'internal scratch']
  %s0 = inlined_call_operand.vmem [shape: f32[2,64], index: 0, kind: input, shape index: {}]
  %s1 = inlined_call_operand.vmem [shape: f32[64,128], index: 1, kind: input, shape index: {}]
  %s2 = inlined_call_operand.vmem [shape: f32[1,128], index: 2, kind: input, shape index: {}]
  %s3 = inlined_call_operand.vmem [shape: f32[128,128], index: 3, kind: input, shape index: {}]
  %s4 = inlined_call_operand.vmem [shape: f32[1,128], index: 4, kind: input, shape index: {}]
  %s5 = inlined_call_operand.vmem [shape: f32[128,6], index: 5, kind: input, shape index: {}]
  %s6 = inlined_call_operand.vmem [shape: f32[1,6], index: 6, kind: input, shape index: {}]
  %s7 = inlined_call_operand.hbm [shape: f32[2,6], index: 7, kind: output, shape index: {}]
  %s8 = sld [smem:[#allocation0]]
  $region38: #{tcnn_forward.1} parent=0
    _
  %s10 = ssub.s32 1, %s8
  %s11 = scalar_select 0, %s10, %s8
  $region1: #{tcnn_forward.1} parent=0
    #allocation2 [shape = 'u8[1024]{0}', space=vmem, size = 0x400, scoped, tag = 'output window, operand 0, single buffered']
    #allocation3 [shape = 's32[1]{0}', space=sflag, size = 0x4, scoped, tag = 'scoped memory for tcnn_forward.1']
    %12 = vsyncpa [#allocation3], 0
    // Predicated region
    $region2: #{tcnn_forward.1} parent=1 // pred_check
      _
    $region3: #{tcnn_forward.1} parent=1 // pred_check_branch
      %14 = sbr.rel (0) target = $region5
    $region4: #{tcnn_forward.1} parent=1 // pred_region
      _
    $region5: #{tcnn_forward.1} parent=1 // pred_fallthru
      _
    // Predicated region
    $region6: #{tcnn_forward.1} parent=1 // pred_check
      _
    $region7: #{tcnn_forward.1} parent=1 // pred_check_branch
      %16 = sbr.rel (0) target = $region9
    $region8: #{tcnn_forward.1} parent=1 // pred_region
      _
    $region9: #{tcnn_forward.1} parent=1 // pred_fallthru
      _
    // Predicated region
    $region10: #{tcnn_forward.1} parent=1 // pred_check
      _
    $region11: #{tcnn_forward.1} parent=1 // pred_check_branch
      %18 = sbr.rel (0) target = $region13
    $region12: #{tcnn_forward.1} parent=1 // pred_region
      _
    $region13: #{tcnn_forward.1} parent=1 // pred_fallthru
      _
    // Predicated region
    $region14: #{tcnn_forward.1} parent=1 // pred_check
      _
    $region15: #{tcnn_forward.1} parent=1 // pred_check_branch
      %20 = sbr.rel (0) target = $region17
    $region16: #{tcnn_forward.1} parent=1 // pred_region
      _
    $region17: #{tcnn_forward.1} parent=1 // pred_fallthru
      _
    // Predicated region
    $region18: #{tcnn_forward.1} parent=1 // pred_check
      _
    $region19: #{tcnn_forward.1} parent=1 // pred_check_branch
      %22 = sbr.rel (0) target = $region21
    $region20: #{tcnn_forward.1} parent=1 // pred_region
      _
    $region21: #{tcnn_forward.1} parent=1 // pred_fallthru
      _
    // Predicated region
    $region22: #{tcnn_forward.1} parent=1 // pred_check
      _
    $region23: #{tcnn_forward.1} parent=1 // pred_check_branch
      %24 = sbr.rel (0) target = $region25
    $region24: #{tcnn_forward.1} parent=1 // pred_region
      _
    $region25: #{tcnn_forward.1} parent=1 // pred_fallthru
      _
    // Predicated region
    $region26: #{tcnn_forward.1} parent=1 // pred_check
      _
    $region27: #{tcnn_forward.1} parent=1 // pred_check_branch
      %26 = sbr.rel (0) target = $region29
    $region28: #{tcnn_forward.1} parent=1 // pred_region
      _
    $region29: #{tcnn_forward.1} parent=1 // pred_fallthru
      _
    %v27 = vld [vmem:[%s0] sm:$0x3]
    %v28 = vld [vmem:[%s1] sm:$0xff]
    %v29 = vld [vmem:[%s1 + $0x8] sm:$0xff]
    %v30 = vld [vmem:[%s1 + $0x10] sm:$0xff]
    %v31 = vld [vmem:[%s1 + $0x18] sm:$0xff]
    %v32 = vld [vmem:[%s1 + $0x20] sm:$0xff]
    %v33 = vld [vmem:[%s1 + $0x28] sm:$0xff]
    %v34 = vld [vmem:[%s1 + $0x30] sm:$0xff]
    %v35 = vld [vmem:[%s1 + $0x38] sm:$0xff]
    %v36 = vld [vmem:[%s2] sm:$0x1]
    %v38 = vlaneseq
    %v39 = vshrl.u32 %v38, 7
    %v40 = vsub.s32 0, %v39
    %v41 = vrot.slane %v36, %v40
    %vm43 = vcmask 523264
    %v45 = vsel %vm43, %v27, 0
    %47 = vmatprep.subr.mxu0 0.0
    %48 = vmatpush1.msra.mxu0 0.0
    %49 = vmatprep.subr.mxu0 0.0
    %50 = vmatpush1.msra.mxu0 0.0
    %51 = vmatprep.subr.mxu0 0.0
    %52 = vmatpush1.msra.mxu0 0.0
    %53 = vmatprep.subr.mxu0 0.0
    %54 = vmatpush1.msra.mxu0 0.0
    %55 = vmatprep.subr.mxu0 0.0
    %56 = vmatpush1.msra.mxu0 0.0
    %57 = vmatprep.subr.mxu0 0.0
    %58 = vmatpush1.msra.mxu0 0.0
    %59 = vmatprep.subr.mxu0 0.0
    %60 = vmatpush1.msra.mxu0 0.0
    %61 = vmatprep.subr.mxu0 0.0
    %62 = vmatpush1.msra.mxu0 0.0
    %63 = vmatprep.subr.mxu0 0.0
    %64 = vmatpush1.msra.mxu0 %v35
    %65 = vmatprep.subr.mxu0 0.0
    %66 = vmatpush1.msra.mxu0 %v34
    %67 = vmatprep.subr.mxu0 0.0
    %68 = vmatpush1.msra.mxu0 %v33
    %69 = vmatprep.subr.mxu0 0.0
    %70 = vmatpush1.msra.mxu0 %v32
    %71 = vmatprep.subr.mxu0 0.0
    %72 = vmatpush1.msra.mxu0 %v31
    %73 = vmatprep.subr.mxu0 0.0
    %74 = vmatpush1.msra.mxu0 %v30
    %75 = vmatprep.subr.mxu0 0.0
    %76 = vmatpush1.msra.mxu0 %v29
    %77 = vmatprep.subr.mxu0 0.0
    %78 = vmatpush1.msra.mxu0 %v28
    %79 = vmatprep.subr.mxu0 0.0
    %80 = vmatpush2.msra.mxu0 0.0
    %81 = vmatprep.subr.mxu0 0.0
    %82 = vmatpush2.msra.mxu0 0.0
    %83 = vmatprep.subr.mxu0 0.0
    %84 = vmatpush2.msra.mxu0 0.0
    %85 = vmatprep.subr.mxu0 0.0
    %86 = vmatpush2.msra.mxu0 0.0
    %87 = vmatprep.subr.mxu0 0.0
    %88 = vmatpush2.msra.mxu0 0.0
    %89 = vmatprep.subr.mxu0 0.0
    %90 = vmatpush2.msra.mxu0 0.0
    %91 = vmatprep.subr.mxu0 0.0
    %92 = vmatpush2.msra.mxu0 0.0
    %93 = vmatprep.subr.mxu0 0.0
    %94 = vmatpush2.msra.mxu0 0.0
    %95 = vmatprep.subr.mxu0 0.0
    %96 = vmatpush2.msra.mxu0 0.0
    %97 = vmatprep.subr.mxu0 0.0
    %98 = vmatpush2.msra.mxu0 0.0
    %99 = vmatprep.subr.mxu0 0.0
    %100 = vmatpush2.msra.mxu0 0.0
    %101 = vmatprep.subr.mxu0 0.0
    %102 = vmatpush2.msra.mxu0 0.0
    %103 = vmatprep.subr.mxu0 0.0
    %104 = vmatpush2.msra.mxu0 0.0
    %105 = vmatprep.subr.mxu0 0.0
    %106 = vmatpush2.msra.mxu0 0.0
    %107 = vmatprep.subr.mxu0 0.0
    %108 = vmatpush2.msra.mxu0 0.0
    %109 = vmatprep.subr.mxu0 0.0
    %110 = vmatpush2.msra.mxu0 0.0
    %111 = vmatprep.mubr.f32.mxu0 0.0
    %112 = vmatmul.mubr.f32.gmra.mxu0 %v45
    %v113 = vpop.f32.mrf.mxu0
    %v114 = vadd.f32 %v41, %v113
    %v115 = vpop.f32.mrf.mxu0
    %116 = vdwg.mxu0
    %v117 = vtanh.pop %v114
    %v118 = vld [vmem:[%s3] sm:$0xff]
    %v119 = vld [vmem:[%s3 + $0x8] sm:$0xff]
    %v120 = vld [vmem:[%s3 + $0x10] sm:$0xff]
    %v121 = vld [vmem:[%s3 + $0x18] sm:$0xff]
    %v122 = vld [vmem:[%s3 + $0x20] sm:$0xff]
    %v123 = vld [vmem:[%s3 + $0x28] sm:$0xff]
    %v124 = vld [vmem:[%s3 + $0x30] sm:$0xff]
    %v125 = vld [vmem:[%s3 + $0x38] sm:$0xff]
    %v126 = vld [vmem:[%s3 + $0x40] sm:$0xff]
    %v127 = vld [vmem:[%s3 + $0x48] sm:$0xff]
    %v128 = vld [vmem:[%s3 + $0x50] sm:$0xff]
    %v129 = vld [vmem:[%s3 + $0x58] sm:$0xff]
    %v130 = vld [vmem:[%s3 + $0x60] sm:$0xff]
    %v131 = vld [vmem:[%s3 + $0x68] sm:$0xff]
    %v132 = vld [vmem:[%s3 + $0x70] sm:$0xff]
    %v133 = vld [vmem:[%s3 + $0x78] sm:$0xff]
    %v134 = vld [vmem:[%s4] sm:$0x1]
    %v136 = vlaneseq
    %v137 = vshrl.u32 %v136, 7
    %v138 = vsub.s32 0, %v137
    %v139 = vrot.slane %v134, %v138
    %141 = vmatprep.subr.mxu0 0.0
    %142 = vmatpush1.msra.mxu0 %v133
    %143 = vmatprep.subr.mxu0 0.0
    %144 = vmatpush1.msra.mxu0 %v132
    %145 = vmatprep.subr.mxu0 0.0
    %146 = vmatpush1.msra.mxu0 %v131
    %147 = vmatprep.subr.mxu0 0.0
    %148 = vmatpush1.msra.mxu0 %v130
    %149 = vmatprep.subr.mxu0 0.0
    %150 = vmatpush1.msra.mxu0 %v129
    %151 = vmatprep.subr.mxu0 0.0
    %152 = vmatpush1.msra.mxu0 %v128
    %153 = vmatprep.subr.mxu0 0.0
    %154 = vmatpush1.msra.mxu0 %v127
    %155 = vmatprep.subr.mxu0 0.0
    %156 = vmatpush1.msra.mxu0 %v126
    %157 = vmatprep.subr.mxu0 0.0
    %158 = vmatpush1.msra.mxu0 %v125
    %159 = vmatprep.subr.mxu0 0.0
    %160 = vmatpush1.msra.mxu0 %v124
    %161 = vmatprep.subr.mxu0 0.0
    %162 = vmatpush1.msra.mxu0 %v123
    %163 = vmatprep.subr.mxu0 0.0
    %164 = vmatpush1.msra.mxu0 %v122
    %165 = vmatprep.subr.mxu0 0.0
    %166 = vmatpush1.msra.mxu0 %v121
    %167 = vmatprep.subr.mxu0 0.0
    %168 = vmatpush1.msra.mxu0 %v120
    %169 = vmatprep.subr.mxu0 0.0
    %170 = vmatpush1.msra.mxu0 %v119
    %171 = vmatprep.subr.mxu0 0.0
    %172 = vmatpush1.msra.mxu0 %v118
    %173 = vmatprep.subr.mxu0 0.0
    %174 = vmatpush2.msra.mxu0 0.0
    %175 = vmatprep.subr.mxu0 0.0
    %176 = vmatpush2.msra.mxu0 0.0
    %177 = vmatprep.subr.mxu0 0.0
    %178 = vmatpush2.msra.mxu0 0.0
    %179 = vmatprep.subr.mxu0 0.0
    %180 = vmatpush2.msra.mxu0 0.0
    %181 = vmatprep.subr.mxu0 0.0
    %182 = vmatpush2.msra.mxu0 0.0
    %183 = vmatprep.subr.mxu0 0.0
    %184 = vmatpush2.msra.mxu0 0.0
    %185 = vmatprep.subr.mxu0 0.0
    %186 = vmatpush2.msra.mxu0 0.0
    %187 = vmatprep.subr.mxu0 0.0
    %188 = vmatpush2.msra.mxu0 0.0
    %189 = vmatprep.subr.mxu0 0.0
    %190 = vmatpush2.msra.mxu0 0.0
    %191 = vmatprep.subr.mxu0 0.0
    %192 = vmatpush2.msra.mxu0 0.0
    %193 = vmatprep.subr.mxu0 0.0
    %194 = vmatpush2.msra.mxu0 0.0
    %195 = vmatprep.subr.mxu0 0.0
    %196 = vmatpush2.msra.mxu0 0.0
    %197 = vmatprep.subr.mxu0 0.0
    %198 = vmatpush2.msra.mxu0 0.0
    %199 = vmatprep.subr.mxu0 0.0
    %200 = vmatpush2.msra.mxu0 0.0
    %201 = vmatprep.subr.mxu0 0.0
    %202 = vmatpush2.msra.mxu0 0.0
    %203 = vmatprep.subr.mxu0 0.0
    %204 = vmatpush2.msra.mxu0 0.0
    %205 = vmatprep.mubr.f32.mxu0 0.0
    %206 = vmatmul.mubr.f32.gmra.mxu0 %v117
    %v207 = vpop.f32.mrf.mxu0
    %v208 = vadd.f32 %v139, %v207
    %v209 = vpop.f32.mrf.mxu0
    %210 = vdwg.mxu0
    %v211 = vtanh.pop %v208
    %v212 = vld [vmem:[%s5] sm:$0xff]
    %v213 = vld [vmem:[%s5 + $0x8] sm:$0xff]
    %v214 = vld [vmem:[%s5 + $0x10] sm:$0xff]
    %v215 = vld [vmem:[%s5 + $0x18] sm:$0xff]
    %v216 = vld [vmem:[%s5 + $0x20] sm:$0xff]
    %v217 = vld [vmem:[%s5 + $0x28] sm:$0xff]
    %v218 = vld [vmem:[%s5 + $0x30] sm:$0xff]
    %v219 = vld [vmem:[%s5 + $0x38] sm:$0xff]
    %v220 = vld [vmem:[%s5 + $0x40] sm:$0xff]
    %v221 = vld [vmem:[%s5 + $0x48] sm:$0xff]
    %v222 = vld [vmem:[%s5 + $0x50] sm:$0xff]
    %v223 = vld [vmem:[%s5 + $0x58] sm:$0xff]
    %v224 = vld [vmem:[%s5 + $0x60] sm:$0xff]
    %v225 = vld [vmem:[%s5 + $0x68] sm:$0xff]
    %v226 = vld [vmem:[%s5 + $0x70] sm:$0xff]
    %v227 = vld [vmem:[%s5 + $0x78] sm:$0xff]
    %v228 = vld [vmem:[%s6] sm:$0x1]
    %v230 = vlaneseq
    %v231 = vshrl.u32 %v230, 7
    %v232 = vsub.s32 0, %v231
    %v233 = vrot.slane %v228, %v232
    %235 = vmatprep.subr.mxu0 0.0
    %236 = vmatpush1.msra.mxu0 %v227
    %237 = vmatprep.subr.mxu0 0.0
    %238 = vmatpush1.msra.mxu0 %v226
    %239 = vmatprep.subr.mxu0 0.0
    %240 = vmatpush1.msra.mxu0 %v225
    %241 = vmatprep.subr.mxu0 0.0
    %242 = vmatpush1.msra.mxu0 %v224
    %243 = vmatprep.subr.mxu0 0.0
    %244 = vmatpush1.msra.mxu0 %v223
    %245 = vmatprep.subr.mxu0 0.0
    %246 = vmatpush1.msra.mxu0 %v222
    %247 = vmatprep.subr.mxu0 0.0
    %248 = vmatpush1.msra.mxu0 %v221
    %249 = vmatprep.subr.mxu0 0.0
    %250 = vmatpush1.msra.mxu0 %v220
    %251 = vmatprep.subr.mxu0 0.0
    %252 = vmatpush1.msra.mxu0 %v219
    %253 = vmatprep.subr.mxu0 0.0
    %254 = vmatpush1.msra.mxu0 %v218
    %255 = vmatprep.subr.mxu0 0.0
    %256 = vmatpush1.msra.mxu0 %v217
    %257 = vmatprep.subr.mxu0 0.0
    %258 = vmatpush1.msra.mxu0 %v216
    %259 = vmatprep.subr.mxu0 0.0
    %260 = vmatpush1.msra.mxu0 %v215
    %261 = vmatprep.subr.mxu0 0.0
    %262 = vmatpush1.msra.mxu0 %v214
    %263 = vmatprep.subr.mxu0 0.0
    %264 = vmatpush1.msra.mxu0 %v213
    %265 = vmatprep.subr.mxu0 0.0
    %266 = vmatpush1.msra.mxu0 %v212
    %267 = vmatprep.subr.mxu0 0.0
    %268 = vmatpush2.msra.mxu0 0.0
    %269 = vmatprep.subr.mxu0 0.0
    %270 = vmatpush2.msra.mxu0 0.0
    %271 = vmatprep.subr.mxu0 0.0
    %272 = vmatpush2.msra.mxu0 0.0
    %273 = vmatprep.subr.mxu0 0.0
    %274 = vmatpush2.msra.mxu0 0.0
    %275 = vmatprep.subr.mxu0 0.0
    %276 = vmatpush2.msra.mxu0 0.0
    %277 = vmatprep.subr.mxu0 0.0
    %278 = vmatpush2.msra.mxu0 0.0
    %279 = vmatprep.subr.mxu0 0.0
    %280 = vmatpush2.msra.mxu0 0.0
    %281 = vmatprep.subr.mxu0 0.0
    %282 = vmatpush2.msra.mxu0 0.0
    %283 = vmatprep.subr.mxu0 0.0
    %284 = vmatpush2.msra.mxu0 0.0
    %285 = vmatprep.subr.mxu0 0.0
    %286 = vmatpush2.msra.mxu0 0.0
    %287 = vmatprep.subr.mxu0 0.0
    %288 = vmatpush2.msra.mxu0 0.0
    %289 = vmatprep.subr.mxu0 0.0
    %290 = vmatpush2.msra.mxu0 0.0
    %291 = vmatprep.subr.mxu0 0.0
    %292 = vmatpush2.msra.mxu0 0.0
    %293 = vmatprep.subr.mxu0 0.0
    %294 = vmatpush2.msra.mxu0 0.0
    %295 = vmatprep.subr.mxu0 0.0
    %296 = vmatpush2.msra.mxu0 0.0
    %297 = vmatprep.subr.mxu0 0.0
    %298 = vmatpush2.msra.mxu0 0.0
    %299 = vmatprep.mubr.f32.mxu0 0.0
    %300 = vmatmul.mubr.f32.gmra.mxu0 %v211
    %v301 = vpop.f32.mrf.mxu0
    %v302 = vadd.f32 %v233, %v301
    %v303 = vpop.f32.mrf.mxu0
    %304 = vdwg.mxu0
    %vm305 = vcmask 41984
    %306 = vst.msk [vmem:[#allocation2] sm:$0x3] %vm305, %v302
    // Predicated region
    $region30: #{tcnn_forward.1} parent=1 // pred_check
      _
    $region31: #{tcnn_forward.1} parent=1 // pred_check_branch
      %308 = sbr.rel (0) target = $region33
    $region32: #{tcnn_forward.1} parent=1 // pred_region
      %s310 = ssub.s32 32, 32
      %311 = vsyncadd [#allocation3], %s310
      %s313 = sshll.u32 [#allocation2], 4
      %s314 = int_to_ptr.vmem [resolvable:$true] %s313
      %316 = dma.vmem_to_hbm [thread:$0]  %s314, 32, %s7, [#allocation3]
    $region33: #{tcnn_forward.1} parent=1 // pred_fallthru
      _
    // Predicated region
    $region34: #{tcnn_forward.1} parent=1 // pred_check
      _
    $region35: #{tcnn_forward.1} parent=1 // pred_check_branch
      %318 = sbr.rel (0) target = $region37
    $region36: #{tcnn_forward.1} parent=1 // pred_region
      %319 = dma.done [#allocation3], 32
    $region37: #{tcnn_forward.1} parent=1 // pred_fallthru
      _
    %320 = vsyncpa [#allocation3], 1

</llo_original>
